<compile_context>
chip_gen: v7x
topology: tpu7x:2x2x1
jax: 0.10.0
libtpu: 0.0.40
codegen_flags: <defaults>
</compile_context>

<pallas_src>
import functools
import math

import numpy as np
import jax
import jax.numpy as jnp
from jax.experimental import pallas as pl
from jax.experimental.pallas import tpu as pltpu


# -----------------------------------------------------------------------------
# Interpolation matrices (scale_factor=2, mode='bilinear', align_corners=True)
# -----------------------------------------------------------------------------
def _upsample_matrix_t(n_in):
    """Transposed interpolation matrix [n_in, 2*n_in]: out = in @ M (2 taps per output)."""
    n_out = 2 * n_in
    m = np.zeros((n_in, n_out), np.float64)
    if n_in == 1:
        m[0, :] = 1.0
        return m
    scale = (n_in - 1) / (n_out - 1)
    for i in range(n_out):
        src = i * scale
        lo = int(np.floor(src))
        hi = min(lo + 1, n_in - 1)
        frac = src - lo
        m[lo, i] += 1.0 - frac
        m[hi, i] += frac
    return m


# -----------------------------------------------------------------------------
# Padded store: zero only the four border slabs, then the interior.
# -----------------------------------------------------------------------------
def _store_padded(o_ref, up3, ph, pw):
    """up3: (CB, Hup, Wup) f32; o_ref block: (1, CB, H2, W2)."""
    cb, hup, wup = up3.shape
    h2, w2 = o_ref.shape[2], o_ref.shape[3]
    dt = o_ref.dtype
    pb = h2 - ph - hup            # bottom pad rows
    pr = w2 - pw - wup            # right pad cols
    if ph > 0:
        o_ref[0, :, 0:ph, :] = jnp.zeros((cb, ph, w2), dt)
    if pb > 0:
        o_ref[0, :, ph + hup:h2, :] = jnp.zeros((cb, pb, w2), dt)
    if pw > 0:
        o_ref[0, :, ph:ph + hup, 0:pw] = jnp.zeros((cb, hup, pw), dt)
    if pr > 0:
        o_ref[0, :, ph:ph + hup, pw + wup:w2] = jnp.zeros((cb, hup, pr), dt)
    o_ref[0, :, ph:ph + hup, pw:pw + wup] = up3.astype(dt)


# -----------------------------------------------------------------------------
# Kernel A: fused Kronecker path (small spatial, no padding, lane-dense output)
#   x1 block: (1, CB, H1*W1)   x2 block: (1, CB, H2*W2)   out block: (1, CB, H2*W2)
# -----------------------------------------------------------------------------
def _up_kron_kernel(x1_ref, x2_ref, wk_ref, o_ref, *, G2):
    j = pl.program_id(1)

    @pl.when(j < G2)
    def _copy():                                     # x2 pass-through channel block
        o_ref[...] = x2_ref[...].astype(o_ref.dtype)

    @pl.when(j >= G2)
    def _upsample():                                 # upsampled x1 channel block
        up = jnp.dot(x1_ref[0], wk_ref[...],
                     preferred_element_type=jnp.float32)   # (CB, Hup*Wup)
        o_ref[0] = up.astype(o_ref.dtype)


# -----------------------------------------------------------------------------
# Kernel B: separable fallback (general spatial sizes / padding), 4-D blocks.
#   H-interp first so the two XLU swaps act on the pre-upsample tensors (2x fewer
#   transposed bytes than upsampling W first).
# -----------------------------------------------------------------------------
def _up_sep_kernel(x1_ref, x2_ref, wht_ref, wwt_ref, o_ref, *, G2, ph, pw):
    j = pl.program_id(1)

    @pl.when(j < G2)
    def _copy():
        o_ref[...] = x2_ref[...].astype(o_ref.dtype)

    @pl.when(j >= G2)
    def _upsample():
        _, cb, h1, w1 = x1_ref.shape
        hup = wht_ref.shape[1]
        wup = wwt_ref.shape[1]
        x = x1_ref[0]                                        # (CB, H1, W1)
        xt = jnp.swapaxes(x, 1, 2)                           # (CB, W1, H1)  XLU (small)
        t = jnp.dot(xt.reshape(cb * w1, h1), wht_ref[...],
                    preferred_element_type=jnp.float32)      # (CB*W1, Hup)
        t = t.astype(x.dtype)                                # keep swap/VMEM in I/O dtype
        t = jnp.swapaxes(t.reshape(cb, w1, hup), 1, 2)       # (CB, Hup, W1)  XLU
        u = jnp.dot(t.reshape(cb * hup, w1), wwt_ref[...],
                    preferred_element_type=jnp.float32)      # (CB*Hup, Wup)
        _store_padded(o_ref, u.reshape(cb, hup, wup), ph, pw)


# -----------------------------------------------------------------------------
# Wrapper
# -----------------------------------------------------------------------------
def up_forward(x1, x2, *, cb_target=128):
    """Pallas implementation of Up.forward(x1, x2) (NCHW in / NCHW out, dtype-preserving)."""
    dtype = jnp.promote_types(x1.dtype, x2.dtype)
    x1 = x1.astype(dtype)
    x2 = x2.astype(dtype)
    N, C1, H1, W1 = x1.shape
    N2, C2, H2, W2 = x2.shape
    assert N == N2, "batch mismatch"
    Hup, Wup = 2 * H1, 2 * W1
    dh, dw = H2 - Hup, W2 - Wup
    assert dh >= 0 and dw >= 0, "x2 must be at least as large as the upsampled x1"
    ph, pw = dh // 2, dw // 2                         # F.pad: left/top get diff // 2
    C_out = C1 + C2
    itemsize = jnp.dtype(dtype).itemsize

    # Channel-block size: divides gcd(C1, C2) (so no block straddles the concat boundary),
    # capped so one output channel block stays <= ~2 MiB (keeps double-buffered pipelining
    # inside the default scoped VMEM on every TPU generation).
    g = math.gcd(C1, C2)
    cb_cap = max(1, (2 << 20) // (H2 * W2 * itemsize))
    limit = max(1, min(cb_target, cb_cap))
    CB = max(d for d in range(1, g + 1) if g % d == 0 and d <= limit)
    G2, G1 = C2 // CB, C1 // CB
    G = G1 + G2                                       # total output channel blocks

    # Kronecker fast path: small spatial, no padding, and CB sublane-aligned (so the
    # flattened (N, C, H*W) layout obeys the (8,128) block rule).
    sub = (8 * 4) // itemsize                         # f32 -> 8 sublanes, bf16 -> 16
    use_kron = (H1 * W1 <= 256) and (dh == 0 and dw == 0) and (CB % sub == 0)

    mh_t = _upsample_matrix_t(H1)                     # (H1, Hup) float64
    mw_t = _upsample_matrix_t(W1)                     # (W1, Wup) float64

    compiler_params = pltpu.CompilerParams(
        dimension_semantics=("parallel", "parallel"),  # batch + channel blocks: megacore
        vmem_limit_bytes=32 * 1024 * 1024,
    )

    if use_kron:
        wk = jnp.asarray(np.kron(mh_t, mw_t), dtype)       # (H1*W1, Hup*Wup), <= ~1 MiB
        x1f = x1.reshape(N, C1, H1 * W1)                   # free (contiguous) reshapes
        x2f = x2.reshape(N, C2, H2 * W2)
        out = pl.pallas_call(
            functools.partial(_up_kron_kernel, G2=G2),
            out_shape=jax.ShapeDtypeStruct((N, C_out, H2 * W2), dtype),
            grid_spec=pltpu.PrefetchScalarGridSpec(
                num_scalar_prefetch=0,
                grid=(N, G),
                in_specs=[
                    # Clamped maps -> repeated block indices are not re-fetched.
                    pl.BlockSpec((1, CB, H1 * W1),
                                 lambda n, j: (n, jnp.maximum(j - G2, 0), 0)),
                    pl.BlockSpec((1, CB, H2 * W2),
                                 lambda n, j: (n, jnp.minimum(j, G2 - 1), 0)),
                    pl.BlockSpec((H1 * W1, Hup * Wup), lambda n, j: (0, 0)),  # fetched once
                ],
                out_specs=pl.BlockSpec((1, CB, H2 * W2), lambda n, j: (n, j, 0)),
            ),
            compiler_params=compiler_params,
        )(x1f, x2f, wk)
        return out.reshape(N, C_out, H2, W2)

    wht = jnp.asarray(mh_t, dtype)                         # (H1, Hup)
    wwt = jnp.asarray(mw_t, dtype)                         # (W1, Wup)
    return pl.pallas_call(
        functools.partial(_up_sep_kernel, G2=G2, ph=ph, pw=pw),
        out_shape=jax.ShapeDtypeStruct((N, C_out, H2, W2), dtype),
        grid_spec=pltpu.PrefetchScalarGridSpec(
            num_scalar_prefetch=0,
            grid=(N, G),
            in_specs=[
                pl.BlockSpec((1, CB, H1, W1),
                             lambda n, j: (n, jnp.maximum(j - G2, 0), 0, 0)),
                pl.BlockSpec((1, CB, H2, W2),
                             lambda n, j: (n, jnp.minimum(j, G2 - 1), 0, 0)),
                pl.BlockSpec((H1, Hup), lambda n, j: (0, 0)),      # fetched once
                pl.BlockSpec((W1, Wup), lambda n, j: (0, 0)),      # fetched once
            ],
            out_specs=pl.BlockSpec((1, CB, H2, W2), lambda n, j: (n, j, 0, 0)),
        ),
        compiler_params=compiler_params,
    )(x1, x2, wht, wwt)


# -----------------------------------------------------------------------------
# Independent numpy reference (per-pixel 2-tap lerp, matches PyTorch semantics)
# -----------------------------------------------------------------------------
def _ref_upsample_bilinear2x(x):
    N, C, H, W = x.shape
    Ho, Wo = 2 * H, 2 * W

    def idx_frac(n_in, n_out):
        if n_in == 1:
            z = np.zeros(n_out, np.int64)
            return z, z, np.zeros(n_out, np.float64)
        src = np.arange(n_out) * (n_in - 1) / (n_out - 1)
        lo = np.floor(src).astype(np.int64)
        hi = np.minimum(lo + 1, n_in - 1)
        return lo, hi, src - lo

    hlo, hhi, hf = idx_frac(H, Ho)
    wlo, whi, wf = idx_frac(W, Wo)
    xh = (x[:, :, hlo, :] * (1.0 - hf)[None, None, :, None]
          + x[:, :, hhi, :] * hf[None, None, :, None])
    out = (xh[:, :, :, wlo] * (1.0 - wf)[None, None, None, :]
           + xh[:, :, :, whi] * wf[None, None, None, :])
    return out.astype(np.float32)


def _ref_up(x1, x2):
    x1 = np.asarray(x1, np.float32)
    x2 = np.asarray(x2, np.float32)
    x1u = _ref_upsample_bilinear2x(x1)
    N, C2, H2, W2 = x2.shape
    dh, dw = H2 - x1u.shape[2], W2 - x1u.shape[3]
    x1p = np.zeros((x1u.shape[0], x1u.shape[1], H2, W2), np.float32)
    x1p[:, :, dh // 2:dh // 2 + x1u.shape[2], dw // 2:dw // 2 + x1u.shape[3]] = x1u
    return np.concatenate([x2, x1p], axis=1)


if __name__ == "__main__":
    key = jax.random.PRNGKey(0)
    ks = jax.random.split(key, 6)
    up_fn = jax.jit(up_forward)

    # Case A: power-of-two decoder stage (no pad) -> Kronecker + lane-dense flat path.
    x1 = jax.random.normal(ks[0], (2, 16, 8, 8), jnp.float32)     # NCHW
    x2 = jax.random.normal(ks[1], (2, 8, 16, 16), jnp.float32)    # NCHW
    out = jax.block_until_ready(up_fn(x1, x2))
    assert out.shape == (2, 24, 16, 16), out.shape
    np.testing.assert_allclose(np.asarray(out), _ref_up(x1, x2), rtol=1e-5, atol=1e-5)

    # Case B: odd spatial sizes (diffY=1, diffX=2) -> separable path + border-only zero pad.
    x1b = jax.random.normal(ks[2], (2, 6, 8, 8), jnp.float32)
    x2b = jax.random.normal(ks[3], (2, 4, 17, 18), jnp.float32)
    outb = jax.block_until_ready(up_fn(x1b, x2b))
    assert outb.shape == (2, 10, 17, 18), outb.shape
    np.testing.assert_allclose(np.asarray(outb), _ref_up(x1b, x2b), rtol=1e-5, atol=1e-5)

    # Case C: bf16 end-to-end (dtype-preserving, halves HBM bytes) -> separable no-pad path.
    x1c = jax.random.normal(ks[4], (2, 16, 8, 8), jnp.bfloat16)
    x2c = jax.random.normal(ks[5], (2, 8, 16, 16), jnp.bfloat16)
    outc = jax.block_until_ready(up_fn(x1c, x2c))
    assert outc.dtype == jnp.bfloat16 and outc.shape == (2, 24, 16, 16)
    ref_c = _ref_up(np.asarray(x1c.astype(jnp.float32)), np.asarray(x2c.astype(jnp.float32)))
    np.testing.assert_allclose(np.asarray(outc.astype(jnp.float32)), ref_c,
                               rtol=5e-2, atol=1e-1)

    assert bool(jnp.all(jnp.isfinite(out))) and bool(jnp.all(jnp.isfinite(outb)))
    print("KERNEL_OK")
</pallas_src>

<mosaic_0001>
module attributes {stable_mosaic.version = 11 : i64} {
  func.func @_up_kron_kernel(%arg0: i32, %arg1: i32, %arg2: memref<1x8x64xf32, #tpu.memory_space<vmem>>, %arg3: memref<1x8x256xf32, #tpu.memory_space<vmem>>, %arg4: memref<64x256xf32, #tpu.memory_space<vmem>>, %arg5: memref<1x8x256xf32, #tpu.memory_space<vmem>>) attributes {dimension_semantics = [#tpu.dimension_semantics<parallel>, #tpu.dimension_semantics<parallel>], iteration_bounds = array<i64: 2, 3>, scalar_prefetch = 0 : i64, scratch_operands = 0 : i64, tpu.core_type = #tpu.core_type<tc>, window_params = [{transform_indices = @transform_0, window_bounds = array<i64: 1, 8, 64>}, {transform_indices = @transform_1, window_bounds = array<i64: 1, 8, 256>}, {pipeline_mode = #tpu.pipeline_mode<synchronous>, transform_indices = @transform_2, window_bounds = array<i64: 64, 256>}, {transform_indices = @transform_3, window_bounds = array<i64: 1, 8, 256>}]} {
    %c1_i32 = arith.constant 1 : i32
    %0 = arith.cmpi slt, %arg1, %c1_i32 : i32
    %1 = arith.extui %0 : i1 to i32
    %c0_i32 = arith.constant 0 : i32
    %2 = arith.cmpi ne, %1, %c0_i32 : i32
    scf.if %2 {
      %c0 = arith.constant 0 : index
      %c0_2 = arith.constant 0 : index
      %c0_3 = arith.constant 0 : index
      %6 = vector.load %arg3[%c0, %c0_2, %c0_3] : memref<1x8x256xf32, #tpu.memory_space<vmem>>, vector<1x8x256xf32>
      %c0_4 = arith.constant 0 : index
      %c0_5 = arith.constant 0 : index
      %c0_6 = arith.constant 0 : index
      %7 = vector.load %arg5[%c0_4, %c0_5, %c0_6] : memref<1x8x256xf32, #tpu.memory_space<vmem>>, vector<1x8x256xf32>
      tpu.vector_store %arg5[%c0_4, %c0_5, %c0_6], %6 {strides = array<i32>} : memref<1x8x256xf32, #tpu.memory_space<vmem>>, vector<1x8x256xf32>,
    } else {
    }
    %c1_i32_0 = arith.constant 1 : i32
    %3 = arith.cmpi sge, %arg1, %c1_i32_0 : i32
    %4 = arith.extui %3 : i1 to i32
    %c0_i32_1 = arith.constant 0 : i32
    %5 = arith.cmpi ne, %4, %c0_i32_1 : i32
    scf.if %5 {
      %c0 = arith.constant 0 : index
      %c0_2 = arith.constant 0 : index
      %c0_3 = arith.constant 0 : index
      %6 = vector.load %arg2[%c0, %c0_2, %c0_3] : memref<1x8x64xf32, #tpu.memory_space<vmem>>, vector<1x8x64xf32>
      %7 = vector.shape_cast %6 : vector<1x8x64xf32> to vector<8x64xf32>
      %c0_4 = arith.constant 0 : index
      %c0_5 = arith.constant 0 : index
      %8 = vector.load %arg4[%c0_4, %c0_5] : memref<64x256xf32, #tpu.memory_space<vmem>>, vector<64x256xf32>
      %cst = arith.constant dense<0.000000e+00> : vector<8x256xf32>
      %9 = tpu.matmul %7, %8, %cst {dimension_numbers = #tpu.dot_dimension_numbers<[1], [0], [0], [1], [0, 0, 1, 1], [], []>} : vector<8x64xf32>, vector<64x256xf32>, vector<8x256xf32> -> vector<8x256xf32>
      %c0_6 = arith.constant 0 : index
      %c0_7 = arith.constant 0 : index
      %c0_8 = arith.constant 0 : index
      %10 = vector.load %arg5[%c0_6, %c0_7, %c0_8] : memref<1x8x256xf32, #tpu.memory_space<vmem>>, vector<1x8x256xf32>
      %11 = vector.shape_cast %10 : vector<1x8x256xf32> to vector<8x256xf32>
      %12 = vector.shape_cast %9 : vector<8x256xf32> to vector<1x8x256xf32>
      tpu.vector_store %arg5[%c0_6, %c0_7, %c0_8], %12 {strides = array<i32>} : memref<1x8x256xf32, #tpu.memory_space<vmem>>, vector<1x8x256xf32>,
    } else {
    }
    return
  }
  func.func @transform_0(%arg0: i32, %arg1: i32) -> (i32, i32, i32) {
    %c1_i32 = arith.constant 1 : i32
    %0 = arith.subi %arg1, %c1_i32 : i32
    %c0_i32 = arith.constant 0 : i32
    %1 = arith.maxsi %0, %c0_i32 : i32
    %c0_i32_0 = arith.constant 0 : i32
    %c0_i32_1 = arith.constant 0 : i32
    return %arg0, %1, %c0_i32_0 : i32, i32, i32
  }
  func.func @transform_1(%arg0: i32, %arg1: i32) -> (i32, i32, i32) {
    %c0_i32 = arith.constant 0 : i32
    %0 = arith.minsi %arg1, %c0_i32 : i32
    %c0_i32_0 = arith.constant 0 : i32
    %c0_i32_1 = arith.constant 0 : i32
    return %arg0, %0, %c0_i32_0 : i32, i32, i32
  }
  func.func @transform_2(%arg0: i32, %arg1: i32) -> (i32, i32) {
    %c0_i32 = arith.constant 0 : i32
    %c0_i32_0 = arith.constant 0 : i32
    %c0_i32_1 = arith.constant 0 : i32
    return %c0_i32, %c0_i32_0 : i32, i32
  }
  func.func @transform_3(%arg0: i32, %arg1: i32) -> (i32, i32, i32) {
    %c0_i32 = arith.constant 0 : i32
    %c0_i32_0 = arith.constant 0 : i32
    return %arg0, %arg1, %c0_i32 : i32, i32, i32
  }
}

</mosaic_0001>

<llo_original>
// kernel: up_forward.1
$region0: #{up_forward.1}
  #allocation0 [shape = 'u32[]', space=smem, size = 0x4, offset = 0x4, fixed_abs, tag = 'smem constant byte address 0x4 - core index']
  #allocation1 [shape = 'u32[144,128]{1,0:T(1,128)}', space=vmem, size = 0x12000, scoped, tag = 'internal scratch']
  %s0 = inlined_call_operand.vmem [shape: f32[2,16,64], index: 0, kind: input, shape index: {}]
  %s1 = inlined_call_operand.vmem [shape: f32[2,8,256], index: 1, kind: input, shape index: {}]
  %s2 = inlined_call_operand.vmem [shape: f32[64,256], index: 2, kind: input, shape index: {}]
  %s3 = inlined_call_operand.vmem [shape: f32[2,24,256], index: 3, kind: output, shape index: {}]
  %s4 = sld [smem:[#allocation0]]
  $region53: #{up_forward.1} parent=0
    _
  %s6 = ssub.s32 1, %s4
  %s7 = scalar_select 0, %s6, %s4
  loop: start=0, step=1, limit=8
  $region2: #{up_forward.1} parent=0 // loop_pre_header
    _
  $region3: #{up_forward.1} parent=0 // loop_header
    %s9 = sphi 0, %s13
    %p10 = scmp.ge.s32.totalorder %s9, 8
    %s16 = sphi 0, %s28
    %s17 = sphi 0, %s24
    %s18 = sphi 0, %s16
    %s19 = sphi 0, %s17
    %s20 = sphi 0, %s18
    %s21 = sphi 0, %s19
    %s39 = sphi 0, %s41
    %s42 = sphi 0, %s39
    %s43 = sphi 0, %s42
    %s59 = sphi 0, %s43
    %s71 = sphi 0, %s73
    %s74 = sphi 0, %s71
    %s75 = sphi 0, %s74
    %s91 = sphi 0, %s75
    %s95 = sphi 0, %s95
    %s97 = sphi 0, %s95
    %s98 = sphi 0, %s97
    %s112 = sphi 0, %s98
    %s120 = sphi 0, %s122
    %s123 = sphi 0, %s120
    %s124 = sphi 0, %s123
    %s140 = sphi 0, %s124
  $region4: #{up_forward.1} parent=0 // loop_header_branch
    %12 = sbr.rel (%p10) target = $region8
  $region5: #{up_forward.1} parent=0 // loop_body
    %s14 = ssub.s32 %s9, 1
    %s15 = ssub.s32 %s9, 2
    %s22 = sadd.s32 1, %s17
    %p23 = scmp.ge.s32.totalorder %s22, 3
    %s24 = scalar_select %p23, 0, %s22
    %s25 = sadd.s32 1, %s16
    %s26 = scalar_select %p23, %s25, %s16
    %p27 = scmp.ge.s32.totalorder %s26, 2
    %s28 = scalar_select %p27, 0, %s26
    %s29 = ssub.s32 %s17, 1
    %p30 = scmp.gt.s32.totalorder %s29, 0
    %s31 = scalar_select %p30, %s29, 0
    %s32 = ssub.s32 %s24, 1
    %p33 = scmp.gt.s32.totalorder %s32, 0
    %s34 = scalar_select %p33, %s32, 0
    %s35 = ssub.s32 %s16, %s28
    %s36 = ssub.s32 %s31, %s34
    %s37 = sor.u32 %s35, %s36
    %p38 = scmp.eq.s32.totalorder %s37, 0
    %s40 = sadd.s32 %s39, 1
    %s41 = scalar_select %p38, %s39, %s40
    %p44 = pneg %p38
    %p45 = scmp.eq.s32.totalorder %s9, 5
    %p46 = por %p44, %p45
    %p47 = scmp.ne.s32.totalorder %s39, %s42
    %p48 = scmp.eq.s32.totalorder %s9, 0
    %p49 = por %p47, %p48
    %p50 = scmp.ne.s32.totalorder %s39, %s42
    %p51 = scmp.eq.s32.totalorder %s14, 5
    %p52 = por %p50, %p51
    %p53 = scmp.ne.s32.totalorder %s42, %s43
    %p54 = scmp.eq.s32.totalorder %s14, 0
    %p55 = por %p53, %p54
    %p56 = scmp.ne.s32.totalorder %s42, %s43
    %p57 = scmp.eq.s32.totalorder %s15, 5
    %p58 = por %p56, %p57
    %p60 = scmp.ne.s32.totalorder %s43, %s59
    %p61 = scmp.eq.s32.totalorder %s15, 0
    %p62 = por %p60, %p61
    %p63 = scmp.lt.s32.totalorder %s17, 0
    %s64 = scalar_select %p63, %s17, 0
    %p65 = scmp.lt.s32.totalorder %s24, 0
    %s66 = scalar_select %p65, %s24, 0
    %s67 = ssub.s32 %s16, %s28
    %s68 = ssub.s32 %s64, %s66
    %s69 = sor.u32 %s67, %s68
    %p70 = scmp.eq.s32.totalorder %s69, 0
    %s72 = sadd.s32 %s71, 1
    %s73 = scalar_select %p70, %s71, %s72
    %p76 = pneg %p70
    %p77 = scmp.eq.s32.totalorder %s9, 5
    %p78 = por %p76, %p77
    %p79 = scmp.ne.s32.totalorder %s71, %s74
    %p80 = scmp.eq.s32.totalorder %s9, 0
    %p81 = por %p79, %p80
    %p82 = scmp.ne.s32.totalorder %s71, %s74
    %p83 = scmp.eq.s32.totalorder %s14, 5
    %p84 = por %p82, %p83
    %p85 = scmp.ne.s32.totalorder %s74, %s75
    %p86 = scmp.eq.s32.totalorder %s14, 0
    %p87 = por %p85, %p86
    %p88 = scmp.ne.s32.totalorder %s74, %s75
    %p89 = scmp.eq.s32.totalorder %s15, 5
    %p90 = por %p88, %p89
    %p92 = scmp.ne.s32.totalorder %s75, %s91
    %p93 = scmp.eq.s32.totalorder %s15, 0
    %p94 = por %p92, %p93
    %s96 = sadd.s32 %s95, 1
    %p99 = scmp.eq.s32.totalorder %s9, 5
    %p100 = scmp.ne.s32.totalorder %s95, %s97
    %p101 = scmp.eq.s32.totalorder %s9, 0
    %p102 = por %p100, %p101
    %p103 = scmp.ne.s32.totalorder %s95, %s97
    %p104 = scmp.eq.s32.totalorder %s14, 5
    %p105 = por %p103, %p104
    %p106 = scmp.ne.s32.totalorder %s97, %s98
    %p107 = scmp.eq.s32.totalorder %s14, 0
    %p108 = por %p106, %p107
    %p109 = scmp.ne.s32.totalorder %s97, %s98
    %p110 = scmp.eq.s32.totalorder %s15, 5
    %p111 = por %p109, %p110
    %p113 = scmp.ne.s32.totalorder %s98, %s112
    %p114 = scmp.eq.s32.totalorder %s15, 0
    %p115 = por %p113, %p114
    %s116 = ssub.s32 %s16, %s28
    %s117 = ssub.s32 %s17, %s24
    %s118 = sor.u32 %s116, %s117
    %p119 = scmp.eq.s32.totalorder %s118, 0
    %s121 = sadd.s32 %s120, 1
    %s122 = scalar_select %p119, %s120, %s121
    %p125 = pneg %p119
    %p126 = scmp.eq.s32.totalorder %s9, 5
    %p127 = por %p125, %p126
    %p128 = scmp.ne.s32.totalorder %s120, %s123
    %p129 = scmp.eq.s32.totalorder %s9, 0
    %p130 = por %p128, %p129
    %p131 = scmp.ne.s32.totalorder %s120, %s123
    %p132 = scmp.eq.s32.totalorder %s14, 5
    %p133 = por %p131, %p132
    %p134 = scmp.ne.s32.totalorder %s123, %s124
    %p135 = scmp.eq.s32.totalorder %s14, 0
    %p136 = por %p134, %p135
    %p137 = scmp.ne.s32.totalorder %s123, %s124
    %p138 = scmp.eq.s32.totalorder %s15, 5
    %p139 = por %p137, %p138
    %p141 = scmp.ne.s32.totalorder %s124, %s140
    %p142 = scmp.eq.s32.totalorder %s15, 0
    %p143 = por %p141, %p142
    %p144 = scmp.le.s32.totalorder 1, %s9
    %p145 = scmp.lt.s32.totalorder %s9, 7
    %p146 = pnand %p144, %p145
    %p147 = pneg %p146
    // Predicated region
    $region9: #{up_forward.1} parent=5 // pred_check
      _
    $region10: #{up_forward.1} parent=5 // pred_check_branch
      %149 = sbr.rel (%p146) target = $region12
    $region11: #{up_forward.1} parent=5 // pred_region
      %s150 = ssub.s32 %s9, 1
      // Predicated region
      $region13: #{up_forward.1} parent=11 // pred_check
        %p151 = pneg %p108
      $region14: #{up_forward.1} parent=11 // pred_check_branch
        %153 = sbr.rel (%p151) target = $region16
      $region15: #{up_forward.1} parent=11 // pred_region
        _
      $region16: #{up_forward.1} parent=11 // pred_fallthru
        _
    $region12: #{up_forward.1} parent=5 // pred_fallthru
      _
    %p154 = scmp.lt.s32.totalorder %s9, 6
    // Predicated region
    $region17: #{up_forward.1} parent=5 // pred_check
      %p155 = pneg %p154
    $region18: #{up_forward.1} parent=5 // pred_check_branch
      %157 = sbr.rel (%p155) target = $region20
    $region19: #{up_forward.1} parent=5 // pred_region
      // Predicated region
      $region21: #{up_forward.1} parent=19 // pred_check
        %p158 = pneg %p49
      $region22: #{up_forward.1} parent=19 // pred_check_branch
        %160 = sbr.rel (%p158) target = $region24
      $region23: #{up_forward.1} parent=19 // pred_region
        %s161 = ssub.s32 %s17, 1
        %p162 = scmp.gt.s32.totalorder %s161, 0
        %s163 = scalar_select %p162, %s161, 0
        %p164 = scmp.lt.s32.totalorder %s16, 1
        %s165 = scalar_select %p164, %s16, 1
        %p166 = scmp.lt.s32.totalorder %s163, 1
        %s167 = scalar_select %p166, %s163, 1
        %s168 = smul.addr %s165, 2
        %s169 = sadd.s32 %s167, %s168
        %s170 = smul.addr %s169, 8
        %s171 = scalar_lea.vmem %s0, %s170
        %s172 = ssub.s32 %s17, 1
        %p173 = scmp.gt.s32.totalorder %s172, 0
        %s174 = scalar_select %p173, %s172, 0
      $region24: #{up_forward.1} parent=19 // pred_fallthru
        _
      // Predicated region
      $region25: #{up_forward.1} parent=19 // pred_check
        %p175 = pneg %p81
      $region26: #{up_forward.1} parent=19 // pred_check_branch
        %177 = sbr.rel (%p175) target = $region28
      $region27: #{up_forward.1} parent=19 // pred_region
        %p178 = scmp.lt.s32.totalorder %s17, 0
        %s179 = scalar_select %p178, %s17, 0
        %p180 = scmp.lt.s32.totalorder %s16, 1
        %s181 = scalar_select %p180, %s16, 1
        %p182 = scmp.lt.s32.totalorder %s179, 0
        %s183 = scalar_select %p182, %s179, 0
        %s184 = smul.addr %s183, 2
        %s185 = smul.addr %s181, 2
        %s186 = sadd.s32 %s184, %s185
        %s187 = smul.addr %s186, 8
        %s188 = scalar_lea.vmem %s1, %s187
        %p189 = scmp.lt.s32.totalorder %s17, 0
        %s190 = scalar_select %p189, %s17, 0
      $region28: #{up_forward.1} parent=19 // pred_fallthru
        _
    $region20: #{up_forward.1} parent=5 // pred_fallthru
      _
    %p191 = scmp.le.s32.totalorder 1, %s9
    %p192 = scmp.lt.s32.totalorder %s9, 7
    %p193 = pnand %p191, %p192
    %p194 = pneg %p193
    // Predicated region
    $region29: #{up_forward.1} parent=5 // pred_check
      _
    $region30: #{up_forward.1} parent=5 // pred_check_branch
      %196 = sbr.rel (%p193) target = $region32
    $region31: #{up_forward.1} parent=5 // pred_region
      %s197 = ssub.s32 %s9, 1
      %s198 = ssub.s32 %s19, 1
      %p199 = scmp.gt.s32.totalorder %s198, 0
      %s200 = scalar_select %p199, %s198, 0
      %p201 = scmp.lt.s32.totalorder %s18, 1
      %s202 = scalar_select %p201, %s18, 1
      %p203 = scmp.lt.s32.totalorder %s200, 1
      %s204 = scalar_select %p203, %s200, 1
      %s205 = smul.addr %s202, 2
      %s206 = sadd.s32 %s204, %s205
      %s207 = smul.addr %s206, 8
      %s208 = scalar_lea.vmem %s0, %s207
      %p209 = pneg %p55
      %p210 = pneg %p52
      %p211 = scmp.lt.s32.totalorder %s19, 0
      %s212 = scalar_select %p211, %s19, 0
      %p213 = scmp.lt.s32.totalorder %s18, 1
      %s214 = scalar_select %p213, %s18, 1
      %p215 = scmp.lt.s32.totalorder %s212, 0
      %s216 = scalar_select %p215, %s212, 0
      %s217 = smul.addr %s216, 2
      %s218 = smul.addr %s214, 2
      %s219 = sadd.s32 %s217, %s218
      %s220 = smul.addr %s219, 8
      %s221 = scalar_lea.vmem %s1, %s220
      %p222 = pneg %p87
      %p223 = pneg %p84
      %p224 = pneg %p108
      %p225 = pneg %p105
      %p226 = pneg %p136
      %p227 = pneg %p133
      %p228 = scmp.lt.s32.totalorder %s18, 1
      %s229 = scalar_select %p228, %s18, 1
      %p230 = scmp.lt.s32.totalorder %s19, 2
      %s231 = scalar_select %p230, %s19, 2
      %s232 = smul.addr %s231, 2
      %s233 = smul.addr %s229, 6
      %s234 = sadd.s32 %s232, %s233
      %s235 = smul.addr %s234, 8
      %s236 = scalar_lea.vmem %s3, %s235
      %s237 = ssub.s32 %s19, 1
      %p238 = scmp.gt.s32.totalorder %s237, 0
      %s239 = scalar_select %p238, %s237, 0
      %p240 = scmp.lt.s32.totalorder %s18, 1
      %s241 = scalar_select %p240, %s18, 1
      %p242 = scmp.lt.s32.totalorder %s239, 1
      %s243 = scalar_select %p242, %s239, 1
      %s244 = smul.addr %s241, 2
      %s245 = sadd.s32 %s243, %s244
      %s246 = smul.addr %s245, 8
      %s247 = scalar_lea.vmem %s0, %s246
      %s248 = ssub.s32 %s19, 1
      %p249 = scmp.gt.s32.totalorder %s248, 0
      %s250 = scalar_select %p249, %s248, 0
      %p251 = scmp.lt.s32.totalorder %s19, 0
      %s252 = scalar_select %p251, %s19, 0
      %p253 = scmp.lt.s32.totalorder %s18, 1
      %s254 = scalar_select %p253, %s18, 1
      %p255 = scmp.lt.s32.totalorder %s252, 0
      %s256 = scalar_select %p255, %s252, 0
      %s257 = smul.addr %s256, 2
      %s258 = smul.addr %s254, 2
      %s259 = sadd.s32 %s257, %s258
      %s260 = smul.addr %s259, 8
      %s261 = scalar_lea.vmem %s1, %s260
      %p262 = scmp.lt.s32.totalorder %s19, 0
      %s263 = scalar_select %p262, %s19, 0
      %p264 = scmp.lt.s32.totalorder %s18, 1
      %s265 = scalar_select %p264, %s18, 1
      %p266 = scmp.lt.s32.totalorder %s19, 2
      %s267 = scalar_select %p266, %s19, 2
      %s268 = smul.addr %s267, 2
      %s269 = smul.addr %s265, 6
      %s270 = sadd.s32 %s268, %s269
      %s271 = smul.addr %s270, 8
      %s272 = scalar_lea.vmem %s3, %s271
      %p273 = scmp.lt.s32.totalorder %s19, 1
      // Predicated region
      $region33: #{up_forward.1} parent=31 // pred_check
        %p274 = pneg %p273
      $region34: #{up_forward.1} parent=31 // pred_check_branch
        %276 = sbr.rel (%p274) target = $region36
      $region35: #{up_forward.1} parent=31 // pred_region
        %v277 = vld [vmem:[%s261] sm:$0xff]
        %v278 = vld [vmem:[%s261 + $0x8] sm:$0xff]
        %279 = vst [vmem:[%s272] sm:$0xff] %v277
        %280 = vst [vmem:[%s272 + $0x8] sm:$0xff] %v278
      $region36: #{up_forward.1} parent=31 // pred_fallthru
        _
      %p281 = scmp.ge.s32.totalorder %s19, 1
      // Predicated region
      $region37: #{up_forward.1} parent=31 // pred_check
        %p282 = pneg %p281
      $region38: #{up_forward.1} parent=31 // pred_check_branch
        %284 = sbr.rel (%p282) target = $region40
      $region39: #{up_forward.1} parent=31 // pred_region
        %v285 = vld [vmem:[%s247] sm:$0xff]
        %v286 = vld [vmem:[%s2] sm:$0xff]
        %v287 = vld [vmem:[%s2 + $0x8] sm:$0xff]
        %v288 = vld [vmem:[%s2 + $0x10] sm:$0xff]
        %v289 = vld [vmem:[%s2 + $0x18] sm:$0xff]
        %v290 = vld [vmem:[%s2 + $0x20] sm:$0xff]
        %v291 = vld [vmem:[%s2 + $0x28] sm:$0xff]
        %v292 = vld [vmem:[%s2 + $0x30] sm:$0xff]
        %v293 = vld [vmem:[%s2 + $0x38] sm:$0xff]
        %v294 = vld [vmem:[%s2 + $0x40] sm:$0xff]
        %v295 = vld [vmem:[%s2 + $0x48] sm:$0xff]
        %v296 = vld [vmem:[%s2 + $0x50] sm:$0xff]
        %v297 = vld [vmem:[%s2 + $0x58] sm:$0xff]
        %v298 = vld [vmem:[%s2 + $0x60] sm:$0xff]
        %v299 = vld [vmem:[%s2 + $0x68] sm:$0xff]
        %v300 = vld [vmem:[%s2 + $0x70] sm:$0xff]
        %v301 = vld [vmem:[%s2 + $0x78] sm:$0xff]
        %vm302 = vcmask 523264
        %v304 = vsel %vm302, %v285, 0
        %306 = vmatprep.subr.mxu0 %v287
        %307 = vmatpush1.msra.mxu0 %v286
        %308 = vmatprep.subr.mxu0 %v289
        %309 = vmatpush1.msra.mxu0 %v288
        %310 = vmatprep.subr.mxu0 %v291
        %311 = vmatpush1.msra.mxu0 %v290
        %312 = vmatprep.subr.mxu0 %v293
        %313 = vmatpush1.msra.mxu0 %v292
        %314 = vmatprep.subr.mxu0 %v295
        %315 = vmatpush1.msra.mxu0 %v294
        %316 = vmatprep.subr.mxu0 %v297
        %317 = vmatpush1.msra.mxu0 %v296
        %318 = vmatprep.subr.mxu0 %v299
        %319 = vmatpush1.msra.mxu0 %v298
        %320 = vmatprep.subr.mxu0 %v301
        %321 = vmatpush1.msra.mxu0 %v300
        %322 = vmatprep.subr.mxu0 0.0
        %323 = vmatpush1.msra.mxu0 0.0
        %324 = vmatprep.subr.mxu0 0.0
        %325 = vmatpush1.msra.mxu0 0.0
        %326 = vmatprep.subr.mxu0 0.0
        %327 = vmatpush1.msra.mxu0 0.0
        %328 = vmatprep.subr.mxu0 0.0
        %329 = vmatpush1.msra.mxu0 0.0
        %330 = vmatprep.subr.mxu0 0.0
        %331 = vmatpush1.msra.mxu0 0.0
        %332 = vmatprep.subr.mxu0 0.0
        %333 = vmatpush1.msra.mxu0 0.0
        %334 = vmatprep.subr.mxu0 0.0
        %335 = vmatpush1.msra.mxu0 0.0
        %336 = vmatprep.subr.mxu0 0.0
        %337 = vmatpush1.msra.mxu0 0.0
        %338 = vmatprep.subr.mxu0 0.0
        %339 = vmatpush1.msra.mxu0 0.0
        %340 = vmatprep.subr.mxu0 0.0
        %341 = vmatpush1.msra.mxu0 0.0
        %342 = vmatprep.subr.mxu0 0.0
        %343 = vmatpush1.msra.mxu0 0.0
        %344 = vmatprep.subr.mxu0 0.0
        %345 = vmatpush1.msra.mxu0 0.0
        %346 = vmatprep.subr.mxu0 0.0
        %347 = vmatpush1.msra.mxu0 0.0
        %348 = vmatprep.subr.mxu0 0.0
        %349 = vmatpush1.msra.mxu0 0.0
        %350 = vmatprep.subr.mxu0 0.0
        %351 = vmatpush1.msra.mxu0 0.0
        %352 = vmatprep.subr.mxu0 0.0
        %353 = vmatpush1.msra.mxu0 0.0
        %354 = vmatprep.subr.mxu0 0.0
        %355 = vmatpush1.msra.mxu0 0.0
        %356 = vmatprep.subr.mxu0 0.0
        %357 = vmatpush1.msra.mxu0 0.0
        %358 = vmatprep.subr.mxu0 0.0
        %359 = vmatpush1.msra.mxu0 0.0
        %360 = vmatprep.subr.mxu0 0.0
        %361 = vmatpush1.msra.mxu0 0.0
        %362 = vmatprep.subr.mxu0 0.0
        %363 = vmatpush1.msra.mxu0 0.0
        %364 = vmatprep.subr.mxu0 0.0
        %365 = vmatpush1.msra.mxu0 0.0
        %366 = vmatprep.subr.mxu0 0.0
        %367 = vmatpush1.msra.mxu0 0.0
        %368 = vmatprep.subr.mxu0 0.0
        %369 = vmatpush1.msra.mxu0 0.0
        %370 = vmatprep.mubr.f32.mxu0 0.0
        %371 = vmatmul.mubr.f32.gmra.mrb[0].mxu0 %v304
        %v372 = vpop.f32.mrb[0].mxu0
        %v373 = vadd.f32 0.0, %v372
        %v374 = vpop.f32.mrb[0].mxu0
        %v375 = vadd.f32 0.0, %v374
        %376 = vdwg.mxu0
        %377 = vst [vmem:[%s272] sm:$0xff] %v373
        %378 = vst [vmem:[%s272 + $0x8] sm:$0xff] %v375
      $region40: #{up_forward.1} parent=31 // pred_fallthru
        _
      %p379 = scmp.lt.s32.totalorder %s18, 1
      %s380 = scalar_select %p379, %s18, 1
      %p381 = scmp.lt.s32.totalorder %s19, 2
      %s382 = scalar_select %p381, %s19, 2
      %s383 = smul.addr %s382, 2
      %s384 = smul.addr %s380, 6
      %s385 = sadd.s32 %s383, %s384
      %s386 = smul.addr %s385, 8
      %s387 = scalar_lea.vmem %s3, %s386
      // Predicated region
      $region41: #{up_forward.1} parent=31 // pred_check
        %p388 = pneg %p133
      $region42: #{up_forward.1} parent=31 // pred_check_branch
        %390 = sbr.rel (%p388) target = $region44
      $region43: #{up_forward.1} parent=31 // pred_region
        _
      $region44: #{up_forward.1} parent=31 // pred_fallthru
        _
    $region32: #{up_forward.1} parent=5 // pred_fallthru
      _
    %p391 = scmp.le.s32.totalorder 2, %s9
    // Predicated region
    $region45: #{up_forward.1} parent=5 // pred_check
      %p392 = pneg %p391
    $region46: #{up_forward.1} parent=5 // pred_check_branch
      %394 = sbr.rel (%p392) target = $region48
    $region47: #{up_forward.1} parent=5 // pred_region
      %s395 = ssub.s32 %s9, 2
      // Predicated region
      $region49: #{up_forward.1} parent=47 // pred_check
        %p396 = pneg %p139
      $region50: #{up_forward.1} parent=47 // pred_check_branch
        %398 = sbr.rel (%p396) target = $region52
      $region51: #{up_forward.1} parent=47 // pred_region
        %p399 = scmp.lt.s32.totalorder %s20, 1
        %s400 = scalar_select %p399, %s20, 1
        %p401 = scmp.lt.s32.totalorder %s21, 2
        %s402 = scalar_select %p401, %s21, 2
        %s403 = smul.addr %s402, 2
        %s404 = smul.addr %s400, 6
        %s405 = sadd.s32 %s403, %s404
        %s406 = smul.addr %s405, 8
        %s407 = scalar_lea.vmem %s3, %s406
      $region52: #{up_forward.1} parent=47 // pred_fallthru
        _
    $region48: #{up_forward.1} parent=5 // pred_fallthru
      _
  $region6: #{up_forward.1} parent=0 // loop_footer
    %s13 = sadd.s32 1, %s9
  $region7: #{up_forward.1} parent=0 // loop_footer_branch
    %8 = sbr.rel target = $region3
  $region8: #{up_forward.1} parent=0 // loop_exit
    _

</llo_original>
